<compile_context>
chip_gen: v7x
topology: tpu7x:2x2x1
jax: 0.10.0
libtpu: 0.0.40
codegen_flags: <defaults>
</compile_context>

<pallas_src>
import functools

import jax
import jax.numpy as jnp
from jax.experimental import pallas as pl
from jax.experimental.pallas import tpu as pltpu

_LANES = 128


def _exercise_kernel(scalars_ref, t_ref, x_ref, a_ref, b_ref, c_ref):
    # scalars_ref: SMEM (2,) f32 -> [elem_add, elem_multiply]
    # t_ref, x_ref: VMEM (rows, 128) inputs
    # a_ref, b_ref, c_ref: VMEM (rows, 128) outputs
    add = scalars_ref[0].astype(t_ref.dtype)
    mul = scalars_ref[1].astype(t_ref.dtype)
    # Straight-line fused chain on the VPU (2 f32 vregs per operand).
    a = t_ref[...] + x_ref[...]
    b = a + add
    c = b * mul
    a_ref[...] = a
    b_ref[...] = b
    c_ref[...] = c


@jax.jit
def exercise_forward(mytensor, x, elem_add, elem_multiply):
    assert mytensor.shape == x.shape and mytensor.dtype == x.dtype
    shape = x.shape
    dtype = x.dtype

    n = 1
    for d in shape:
        n *= d
    assert n % _LANES == 0, "total element count must be a multiple of 128"
    rows = n // _LANES  # 16 for (2,4,16,16)

    # Lane-dense 2D view of the contiguous NCHW data (free reshape under jit).
    t2 = mytensor.reshape(rows, _LANES)
    x2 = x.reshape(rows, _LANES)

    # Runtime scalars: built inside the jitted trace, stored as f32 in SMEM
    # (cast in-kernel), so value changes never force a recompile and there is
    # no per-call host round trip.
    scalars = jnp.stack(
        [jnp.asarray(elem_add, jnp.float32), jnp.asarray(elem_multiply, jnp.float32)]
    )

    full = pl.BlockSpec((rows, _LANES), lambda: (0, 0))
    out_sds = jax.ShapeDtypeStruct((rows, _LANES), dtype)

    a2, b2, c2 = pl.pallas_call(
        _exercise_kernel,
        grid=(),
        in_specs=[
            pl.BlockSpec(memory_space=pltpu.MemorySpace.SMEM),
            full,
            full,
        ],
        out_specs=(full, full, full),
        out_shape=(out_sds, out_sds, out_sds),
    )(scalars, t2, x2)

    return a2.reshape(shape), b2.reshape(shape), c2.reshape(shape)


if __name__ == "__main__":
    key = jax.random.PRNGKey(0)
    k_t, k_x = jax.random.split(key)

    B, C, H, W = 2, 4, 16, 16
    # Deterministic "parameters" of the module.
    mytensor = jax.random.normal(k_t, (B, C, H, W), dtype=jnp.float32)
    elem_add = 3
    elem_multiply = 2

    # Example input.
    x = jax.random.normal(k_x, (B, C, H, W), dtype=jnp.float32)

    a, b, c = exercise_forward(mytensor, x, elem_add, elem_multiply)
    jax.block_until_ready((a, b, c))

    # Pure-JAX reference check.
    a_ref = mytensor + x
    b_ref = a_ref + elem_add
    c_ref = b_ref * elem_multiply
    assert a.shape == a_ref.shape and b.shape == b_ref.shape and c.shape == c_ref.shape
    assert jnp.allclose(a, a_ref, atol=1e-6)
    assert jnp.allclose(b, b_ref, atol=1e-6)
    assert jnp.allclose(c, c_ref, atol=1e-6)

    print("KERNEL_OK")
</pallas_src>

<mosaic_0001>
module attributes {stable_mosaic.version = 11 : i64} {
  func.func @_exercise_kernel(%arg0: memref<2xf32, #tpu.memory_space<smem>>, %arg1: memref<16x128xf32, #tpu.memory_space<vmem>>, %arg2: memref<16x128xf32, #tpu.memory_space<vmem>>, %arg3: memref<16x128xf32, #tpu.memory_space<vmem>>, %arg4: memref<16x128xf32, #tpu.memory_space<vmem>>, %arg5: memref<16x128xf32, #tpu.memory_space<vmem>>) attributes {dimension_semantics = [], scalar_prefetch = 0 : i64, scratch_operands = 0 : i64, tpu.core_type = #tpu.core_type<tc>} {
    %c0 = arith.constant 0 : index
    %0 = memref.load %arg0[%c0] : memref<2xf32, #tpu.memory_space<smem>>
    %c1 = arith.constant 1 : index
    %1 = memref.load %arg0[%c1] : memref<2xf32, #tpu.memory_space<smem>>
    %c0_0 = arith.constant 0 : index
    %c0_1 = arith.constant 0 : index
    %2 = vector.load %arg1[%c0_0, %c0_1] : memref<16x128xf32, #tpu.memory_space<vmem>>, vector<16x128xf32>
    %c0_2 = arith.constant 0 : index
    %c0_3 = arith.constant 0 : index
    %3 = vector.load %arg2[%c0_2, %c0_3] : memref<16x128xf32, #tpu.memory_space<vmem>>, vector<16x128xf32>
    %4 = arith.addf %2, %3 : vector<16x128xf32>
    %5 = vector.broadcast %0 : f32 to vector<16x128xf32>
    %6 = arith.addf %4, %5 : vector<16x128xf32>
    %7 = vector.broadcast %1 : f32 to vector<16x128xf32>
    %8 = arith.mulf %6, %7 : vector<16x128xf32>
    %c0_4 = arith.constant 0 : index
    %c0_5 = arith.constant 0 : index
    %9 = vector.load %arg3[%c0_4, %c0_5] : memref<16x128xf32, #tpu.memory_space<vmem>>, vector<16x128xf32>
    tpu.vector_store %arg3[%c0_4, %c0_5], %4 {strides = array<i32>} : memref<16x128xf32, #tpu.memory_space<vmem>>, vector<16x128xf32>,
    %c0_6 = arith.constant 0 : index
    %c0_7 = arith.constant 0 : index
    %10 = vector.load %arg4[%c0_6, %c0_7] : memref<16x128xf32, #tpu.memory_space<vmem>>, vector<16x128xf32>
    tpu.vector_store %arg4[%c0_6, %c0_7], %6 {strides = array<i32>} : memref<16x128xf32, #tpu.memory_space<vmem>>, vector<16x128xf32>,
    %c0_8 = arith.constant 0 : index
    %c0_9 = arith.constant 0 : index
    %11 = vector.load %arg5[%c0_8, %c0_9] : memref<16x128xf32, #tpu.memory_space<vmem>>, vector<16x128xf32>
    tpu.vector_store %arg5[%c0_8, %c0_9], %8 {strides = array<i32>} : memref<16x128xf32, #tpu.memory_space<vmem>>, vector<16x128xf32>,
    return
  }
}

</mosaic_0001>

<llo_original>
// kernel: exercise_forward.1
$region0: #{exercise_forward.1}
  #allocation0 [shape = 'u32[]', space=smem, size = 0x4, offset = 0x4, fixed_abs, tag = 'smem constant byte address 0x4 - core index']
  #allocation1 [shape = 'u32[144,128]{1,0:T(1,128)}', space=vmem, size = 0x12000, scoped, tag = 'internal scratch']
  %s0 = inlined_call_operand.vmem [shape: f32[2], index: 0, kind: input, shape index: {}]
  %s1 = inlined_call_operand.vmem [shape: f32[16,128], index: 1, kind: input, shape index: {}]
  %s2 = inlined_call_operand.vmem [shape: f32[16,128], index: 2, kind: input, shape index: {}]
  %s3 = inlined_call_operand.vmem [shape: f32[16,128], index: 3, kind: output, shape index: {0}]
  %s4 = inlined_call_operand.vmem [shape: f32[16,128], index: 4, kind: output, shape index: {1}]
  %s5 = inlined_call_operand.vmem [shape: f32[16,128], index: 5, kind: output, shape index: {2}]
  %6 = xla_tuple %s3, %s4, %s5
  %s7 = sld [smem:[#allocation0]]
  $region42: #{exercise_forward.1} parent=0
    _
  %s9 = ssub.s32 1, %s7
  %s10 = scalar_select 0, %s9, %s7
  $region1: #{exercise_forward.1} parent=0
    #allocation2 [shape = 'u8[512]{0}', space=smem, size = 0x200, scoped, tag = 'input window, operand 0, single buffered']
    #allocation3 [shape = 's32[1]{0}', space=sflag, size = 0x4, scoped, tag = 'scoped memory for exercise_forward.1']
    %11 = vsyncpa [#allocation3], 0
    // Predicated region
    $region2: #{exercise_forward.1} parent=1 // pred_check
      _
    $region3: #{exercise_forward.1} parent=1 // pred_check_branch
      %13 = sbr.rel (0) target = $region5
    $region4: #{exercise_forward.1} parent=1 // pred_region
      %s15 = ssub.s32 16, 16
      %16 = vsyncadd [#allocation3], %s15
      %s18 = sshll.u32 %s0, 4
      %s19 = int_to_ptr.vmem [resolvable:$true] %s18
      %21 = dma.vmem_to_smem %s19, 16, [#allocation2], [#allocation3]
    $region5: #{exercise_forward.1} parent=1 // pred_fallthru
      _
    // Predicated region
    $region6: #{exercise_forward.1} parent=1 // pred_check
      _
    $region7: #{exercise_forward.1} parent=1 // pred_check_branch
      %23 = sbr.rel (0) target = $region9
    $region8: #{exercise_forward.1} parent=1 // pred_region
      _
    $region9: #{exercise_forward.1} parent=1 // pred_fallthru
      _
    // Predicated region
    $region10: #{exercise_forward.1} parent=1 // pred_check
      _
    $region11: #{exercise_forward.1} parent=1 // pred_check_branch
      %25 = sbr.rel (0) target = $region13
    $region12: #{exercise_forward.1} parent=1 // pred_region
      _
    $region13: #{exercise_forward.1} parent=1 // pred_fallthru
      _
    // Predicated region
    $region14: #{exercise_forward.1} parent=1 // pred_check
      _
    $region15: #{exercise_forward.1} parent=1 // pred_check_branch
      %27 = sbr.rel (0) target = $region17
    $region16: #{exercise_forward.1} parent=1 // pred_region
      %28 = dma.done [#allocation3], 16
    $region17: #{exercise_forward.1} parent=1 // pred_fallthru
      _
    %29 = sfence
    %s30 = sld [smem:[#allocation2]]
    %s31 = sld [smem:[#allocation2 + $0x1]]
    %v32 = vld [vmem:[%s1] sm:$0xff]
    %v33 = vld [vmem:[%s1 + $0x8] sm:$0xff]
    %v34 = vld [vmem:[%s2] sm:$0xff]
    %v35 = vld [vmem:[%s2 + $0x8] sm:$0xff]
    %v36 = vadd.f32 %v32, %v34
    %v37 = vadd.f32 %v33, %v35
    %v38 = vstv %s30
    %v39 = vadd.f32 %v36, %v38
    %v40 = vadd.f32 %v37, %v38
    %v41 = vstv %s31
    %v42 = vmul.f32 %v39, %v41
    %v43 = vmul.f32 %v40, %v41
    %44 = vst [vmem:[%s3] sm:$0xff] %v36
    %45 = vst [vmem:[%s3 + $0x8] sm:$0xff] %v37
    %46 = vst [vmem:[%s4] sm:$0xff] %v39
    %47 = vst [vmem:[%s4 + $0x8] sm:$0xff] %v40
    %48 = vst [vmem:[%s5] sm:$0xff] %v42
    %49 = vst [vmem:[%s5 + $0x8] sm:$0xff] %v43
    // Predicated region
    $region18: #{exercise_forward.1} parent=1 // pred_check
      _
    $region19: #{exercise_forward.1} parent=1 // pred_check_branch
      %51 = sbr.rel (0) target = $region21
    $region20: #{exercise_forward.1} parent=1 // pred_region
      _
    $region21: #{exercise_forward.1} parent=1 // pred_fallthru
      _
    // Predicated region
    $region22: #{exercise_forward.1} parent=1 // pred_check
      _
    $region23: #{exercise_forward.1} parent=1 // pred_check_branch
      %53 = sbr.rel (0) target = $region25
    $region24: #{exercise_forward.1} parent=1 // pred_region
      _
    $region25: #{exercise_forward.1} parent=1 // pred_fallthru
      _
    // Predicated region
    $region26: #{exercise_forward.1} parent=1 // pred_check
      _
    $region27: #{exercise_forward.1} parent=1 // pred_check_branch
      %55 = sbr.rel (0) target = $region29
    $region28: #{exercise_forward.1} parent=1 // pred_region
      _
    $region29: #{exercise_forward.1} parent=1 // pred_fallthru
      _
    // Predicated region
    $region30: #{exercise_forward.1} parent=1 // pred_check
      _
    $region31: #{exercise_forward.1} parent=1 // pred_check_branch
      %57 = sbr.rel (0) target = $region33
    $region32: #{exercise_forward.1} parent=1 // pred_region
      _
    $region33: #{exercise_forward.1} parent=1 // pred_fallthru
      _
    // Predicated region
    $region34: #{exercise_forward.1} parent=1 // pred_check
      _
    $region35: #{exercise_forward.1} parent=1 // pred_check_branch
      %59 = sbr.rel (0) target = $region37
    $region36: #{exercise_forward.1} parent=1 // pred_region
      _
    $region37: #{exercise_forward.1} parent=1 // pred_fallthru
      _
    // Predicated region
    $region38: #{exercise_forward.1} parent=1 // pred_check
      _
    $region39: #{exercise_forward.1} parent=1 // pred_check_branch
      %61 = sbr.rel (0) target = $region41
    $region40: #{exercise_forward.1} parent=1 // pred_region
      _
    $region41: #{exercise_forward.1} parent=1 // pred_fallthru
      _
    %62 = vsyncpa [#allocation3], 1

</llo_original>
